<compile_context>
chip_gen: v7x
topology: tpu7x:2x2x1
jax: 0.10.0
libtpu: 0.0.40
codegen_flags: <defaults>
</compile_context>

<pallas_src>
import jax
import jax.numpy as jnp
from jax.experimental import pallas as pl
from jax.experimental.pallas import tpu as pltpu


_LANE = 128
_SUBLANE = 8
_ROW_TILE = 4096                # row tile (in original rows) for the tiled path
_FUSED_ROW_CUTOFF = 1024        # rows at/below which the grid-free path is used
_FUSED_BYTES_CUTOFF = 2 << 20   # ...and its VMEM estimate must stay under this
_FUSED_VMEM_LIMIT = 16 << 20    # explicit scoped-VMEM limit for the fused call


def _round_up(x, m):
    return (x + m - 1) // m * m


def _choose_tile(rows, max_tile, align):
    """Row-tile: multiple of `align`, <= max_tile, and (when possible) small
    enough that the grid has >= 2 steps so both v7x TensorCores get work."""
    if rows <= align:
        return rows                              # single (full, possibly small) block
    two_step = _round_up(-(-rows // 2), align)   # ceil(rows/2) rounded up
    return max(align, min(max_tile, two_step))


# ---------------------------------------------------------------------------
# Kernels
# ---------------------------------------------------------------------------
def _linear_tanh_kernel(x_ref, w_ref, b_ref, o_ref):
    # x: [tm, K], w: [K, Od], b: [1, Od], o: [tm, Od]
    acc = jnp.dot(x_ref[...], w_ref[...], preferred_element_type=jnp.float32)
    o_ref[...] = jnp.tanh(acc + b_ref[...]).astype(o_ref.dtype)


def _make_fused_kernel(frag_rows):
    """Grid-free kernel: copy fragments into one VMEM scratch, then a single
    dot + bias + tanh + store.  The concatenation never touches HBM."""
    offs = [0]
    for r in frag_rows:
        offs.append(offs[-1] + r)
    nf = len(frag_rows)

    def kernel(*refs):
        w_ref = refs[nf]        # [L, O]
        b_ref = refs[nf + 1]    # [1, O]
        o_ref = refs[nf + 2]    # [n_total, O]
        x_scr = refs[nf + 3]    # [n_total, L] VMEM scratch
        if nf == 1:
            x = refs[0][...]
        else:
            for f in range(nf):
                x_scr[offs[f]:offs[f + 1], :] = refs[f][...]
            x = x_scr[...]
        acc = jnp.dot(x, w_ref[...], preferred_element_type=jnp.float32)  # one MXU pass
        o_ref[...] = jnp.tanh(acc + b_ref[...]).astype(o_ref.dtype)       # one store

    return kernel


# ---------------------------------------------------------------------------
# Module wrapper
# ---------------------------------------------------------------------------
class ControllerPallas:
    """Pallas TPU equivalent of the PyTorch Controller module.

    __call__(*inputs) == tanh(Linear(cat(inputs, dim=0)))
    """

    def __init__(self, weight, bias):
        # weight: [output_size, latent_size] (nn.Linear convention), bias: [output_size]
        out_size, latent = weight.shape
        self.latent_size = int(latent)
        self.output_size = int(out_size)

        w_t = jnp.asarray(weight).T                      # [L, O], one-time transpose
        self.w_t = w_t
        self.b_row = jnp.asarray(bias).reshape(1, out_size)

        # Row-packing factor: pack rows so the packed output width is exactly
        # one 128-lane row -> lane-dense stores and K = pack*L on the MXU.
        pack = _LANE // out_size if (_LANE % out_size == 0) else 1
        self.pack = pack
        if pack > 1:
            # Block-diagonal weight [pack*L, pack*O] with `pack` copies of W.T.
            self.w_packed = jnp.kron(jnp.eye(pack, dtype=w_t.dtype), w_t)
            self.b_packed = jnp.tile(self.b_row, (1, pack))   # [1, pack*O]
        else:
            self.w_packed = w_t
            self.b_packed = self.b_row

    # -- large-N path: row-tiled, pipelined, megacore-parallel ---------------
    def _tiled_forward(self, x):
        n = int(x.shape[0])
        L, O, pack = self.latent_size, self.output_size, self.pack

        if pack > 1 and n % pack == 0:
            # Packed: [n, L] -> [n/pack, pack*L] (free reshape), lane-dense out.
            rows, kdim, odim = n // pack, pack * L, pack * O
            xin, w, b = x.reshape(rows, kdim), self.w_packed, self.b_packed
            max_tile = max(_ROW_TILE // pack, _SUBLANE)
        else:
            # Fallback: direct (n, O) output (full-dim last axis, masked stores).
            rows, kdim, odim = n, L, O
            xin, w, b = x, self.w_t, self.b_row
            max_tile = _ROW_TILE

        tm = _choose_tile(rows, max_tile, _SUBLANE)
        out = pl.pallas_call(
            _linear_tanh_kernel,
            out_shape=jax.ShapeDtypeStruct((rows, odim), x.dtype),
            grid=(pl.cdiv(rows, tm),),
            in_specs=[
                pl.BlockSpec((tm, kdim), lambda i: (i, 0)),    # pipelined rows
                pl.BlockSpec((kdim, odim), lambda i: (0, 0)),  # resident weight
                pl.BlockSpec((1, odim), lambda i: (0, 0)),     # resident bias
            ],
            out_specs=pl.BlockSpec((tm, odim), lambda i: (i, 0)),
            compiler_params=pltpu.CompilerParams(
                dimension_semantics=("parallel",),  # shard row tiles across TCs
            ),
        )(xin, w, b)
        return out.reshape(n, O)                               # free for packed path

    # -- dispatch -------------------------------------------------------------
    def __call__(self, *inputs):
        sizes = [int(x.shape[0]) for x in inputs]
        n_total = sum(sizes)
        dtype = inputs[0].dtype
        itemsize = jnp.dtype(dtype).itemsize
        L, O = self.latent_size, self.output_size

        # Fused-path VMEM estimate: fragments + concat scratch + weights +
        # output + f32 acc/tanh temporaries.
        fused_bytes = (
            2 * n_total * L * itemsize
            + L * O * self.w_t.dtype.itemsize
            + O * 4
            + n_total * O * itemsize
            + 2 * n_total * O * 4
        )

        if n_total <= _FUSED_ROW_CUTOFF and fused_bytes <= _FUSED_BYTES_CUTOFF:
            # Tiny: one grid-free call, fragments fed directly.
            kernel = _make_fused_kernel(sizes)
            vmem = pl.BlockSpec(memory_space=pltpu.MemorySpace.VMEM)
            return pl.pallas_call(
                kernel,
                out_shape=jax.ShapeDtypeStruct((n_total, O), dtype),
                in_specs=[vmem] * (len(inputs) + 2),
                out_specs=vmem,
                scratch_shapes=[pltpu.VMEM((n_total, L), dtype)],
                compiler_params=pltpu.CompilerParams(
                    vmem_limit_bytes=_FUSED_VMEM_LIMIT),
            )(*inputs, self.w_t, self.b_row)

        # Large N: tiled packed path, one call per fragment so the input concat
        # never materializes; only the narrow outputs are joined.
        # TODO(synk): a single PrefetchScalarGridSpec call writing every
        # fragment in place would also remove the output concat for the (rare)
        # multi-fragment large-N case.
        outs = [self._tiled_forward(x) for x in inputs]
        return outs[0] if len(outs) == 1 else jnp.concatenate(outs, axis=0)


# ---------------------------------------------------------------------------
# Demo / self-check
# ---------------------------------------------------------------------------
if __name__ == "__main__":
    latent_size = 32
    output_size = 8

    key = jax.random.PRNGKey(0)
    k_w, k_b, k_x1, k_x2, k_x3, k_x4 = jax.random.split(key, 6)

    # nn.Linear-style init: uniform(-1/sqrt(L), 1/sqrt(L)).
    bound = 1.0 / (latent_size ** 0.5)
    weight = jax.random.uniform(
        k_w, (output_size, latent_size), jnp.float32, -bound, bound)
    bias = jax.random.uniform(k_b, (output_size,), jnp.float32, -bound, bound)

    controller = ControllerPallas(weight, bias)

    def ref_fn(*xs):
        return jnp.tanh(jnp.concatenate(xs, axis=0) @ weight.T + bias)

    # --- tiny multi-fragment case: grid-free fused path, no HBM concat ---
    x1 = jax.random.normal(k_x1, (2, latent_size), jnp.float32)
    x2 = jax.random.normal(k_x2, (3, latent_size), jnp.float32)
    out = jax.block_until_ready(controller(x1, x2))
    assert out.shape == (5, output_size)
    assert jnp.allclose(out, ref_fn(x1, x2), atol=1e-5, rtol=1e-5)

    # --- large single fragment, divisible by pack: packed lane-dense path ---
    x3 = jax.random.normal(k_x3, (2048, latent_size), jnp.float32)
    out3 = jax.block_until_ready(controller(x3))
    assert out3.shape == (2048, output_size)
    assert jnp.allclose(out3, ref_fn(x3), atol=1e-5, rtol=1e-5)

    # --- large single fragment, NOT divisible by pack: direct-width fallback ---
    x4 = jax.random.normal(k_x4, (2040, latent_size), jnp.float32)
    out4 = jax.block_until_ready(controller(x4))
    assert out4.shape == (2040, output_size)
    assert jnp.allclose(out4, ref_fn(x4), atol=1e-5, rtol=1e-5)

    print("KERNEL_OK")
</pallas_src>

<mosaic_0001>
module attributes {stable_mosaic.version = 11 : i64} {
  func.func @kernel(%arg0: memref<2x32xf32, #tpu.memory_space<vmem>>, %arg1: memref<3x32xf32, #tpu.memory_space<vmem>>, %arg2: memref<32x8xf32, #tpu.memory_space<vmem>>, %arg3: memref<1x8xf32, #tpu.memory_space<vmem>>, %arg4: memref<5x8xf32, #tpu.memory_space<vmem>>, %arg5: memref<5x32xf32, #tpu.memory_space<vmem>>) attributes {dimension_semantics = [], scalar_prefetch = 0 : i64, scratch_operands = 1 : i64, tpu.core_type = #tpu.core_type<tc>} {
    %c0 = arith.constant 0 : index
    %c0_0 = arith.constant 0 : index
    %0 = vector.load %arg0[%c0, %c0_0] : memref<2x32xf32, #tpu.memory_space<vmem>>, vector<2x32xf32>
    %c0_1 = arith.constant 0 : index
    %c0_2 = arith.constant 0 : index
    %1 = vector.load %arg5[%c0_1, %c0_2] : memref<5x32xf32, #tpu.memory_space<vmem>>, vector<2x32xf32>
    tpu.vector_store %arg5[%c0_1, %c0_2], %0 {strides = array<i32>} : memref<5x32xf32, #tpu.memory_space<vmem>>, vector<2x32xf32>,
    %c0_3 = arith.constant 0 : index
    %c0_4 = arith.constant 0 : index
    %2 = vector.load %arg1[%c0_3, %c0_4] : memref<3x32xf32, #tpu.memory_space<vmem>>, vector<3x32xf32>
    %c2 = arith.constant 2 : index
    %c0_5 = arith.constant 0 : index
    %3 = vector.load %arg5[%c2, %c0_5] : memref<5x32xf32, #tpu.memory_space<vmem>>, vector<3x32xf32>
    tpu.vector_store %arg5[%c2, %c0_5], %2 {strides = array<i32>} : memref<5x32xf32, #tpu.memory_space<vmem>>, vector<3x32xf32>,
    %c0_6 = arith.constant 0 : index
    %c0_7 = arith.constant 0 : index
    %4 = vector.load %arg5[%c0_6, %c0_7] : memref<5x32xf32, #tpu.memory_space<vmem>>, vector<5x32xf32>
    %c0_8 = arith.constant 0 : index
    %c0_9 = arith.constant 0 : index
    %5 = vector.load %arg2[%c0_8, %c0_9] : memref<32x8xf32, #tpu.memory_space<vmem>>, vector<32x8xf32>
    %cst = arith.constant dense<0.000000e+00> : vector<5x8xf32>
    %6 = tpu.matmul %4, %5, %cst {dimension_numbers = #tpu.dot_dimension_numbers<[1], [0], [0], [1], [0, 0, 1, 1], [], []>} : vector<5x32xf32>, vector<32x8xf32>, vector<5x8xf32> -> vector<5x8xf32>
    %c0_10 = arith.constant 0 : index
    %c0_11 = arith.constant 0 : index
    %7 = vector.load %arg3[%c0_10, %c0_11] : memref<1x8xf32, #tpu.memory_space<vmem>>, vector<1x8xf32>
    %8 = vector.broadcast %7 : vector<1x8xf32> to vector<5x8xf32>
    %9 = arith.addf %6, %8 : vector<5x8xf32>
    %10 = math.tanh %9 : vector<5x8xf32>
    %c0_12 = arith.constant 0 : index
    %c0_13 = arith.constant 0 : index
    %11 = vector.load %arg4[%c0_12, %c0_13] : memref<5x8xf32, #tpu.memory_space<vmem>>, vector<5x8xf32>
    tpu.vector_store %arg4[%c0_12, %c0_13], %10 {strides = array<i32>} : memref<5x8xf32, #tpu.memory_space<vmem>>, vector<5x8xf32>,
    return
  }
}

</mosaic_0001>

<llo_original>
// kernel: tpu_custom_call.1
$region0: #{tpu_custom_call.1}
  #allocation0 [shape = 'u32[]', space=smem, size = 0x4, offset = 0x4, fixed_abs, tag = 'smem constant byte address 0x4 - core index']
  #allocation1 [shape = 'u32[144,128]{1,0:T(1,128)}', space=vmem, size = 0x12000, scoped, tag = 'internal scratch']
  #allocation2 [shape = 'f32[5,32]{1,0:T(8,128)}', space=vmem, size = 0x1000, scoped, tag = 'scratch operand']
  %s0 = inlined_call_operand.vmem [shape: f32[2,32], index: 0, kind: input, shape index: {}]
  %s1 = inlined_call_operand.vmem [shape: f32[3,32], index: 1, kind: input, shape index: {}]
  %s2 = inlined_call_operand.vmem [shape: f32[32,8], index: 2, kind: input, shape index: {}]
  %s3 = inlined_call_operand.vmem [shape: f32[1,8], index: 3, kind: input, shape index: {}]
  %s4 = inlined_call_operand.hbm [shape: f32[5,8], index: 4, kind: output, shape index: {}]
  %s5 = sld [smem:[#allocation0]]
  $region26: #{tpu_custom_call.1} parent=0
    _
  %s7 = ssub.s32 1, %s5
  %s8 = scalar_select 0, %s7, %s5
  $region1: #{tpu_custom_call.1} parent=0
    #allocation3 [shape = 'u8[4096]{0}', space=vmem, size = 0x1000, scoped, tag = 'output window, operand 0, single buffered']
    #allocation4 [shape = 's32[1]{0}', space=sflag, size = 0x4, scoped, tag = 'scoped memory for tpu_custom_call.1']
    %9 = vsyncpa [#allocation4], 0
    // Predicated region
    $region2: #{tpu_custom_call.1} parent=1 // pred_check
      _
    $region3: #{tpu_custom_call.1} parent=1 // pred_check_branch
      %11 = sbr.rel (0) target = $region5
    $region4: #{tpu_custom_call.1} parent=1 // pred_region
      _
    $region5: #{tpu_custom_call.1} parent=1 // pred_fallthru
      _
    // Predicated region
    $region6: #{tpu_custom_call.1} parent=1 // pred_check
      _
    $region7: #{tpu_custom_call.1} parent=1 // pred_check_branch
      %13 = sbr.rel (0) target = $region9
    $region8: #{tpu_custom_call.1} parent=1 // pred_region
      _
    $region9: #{tpu_custom_call.1} parent=1 // pred_fallthru
      _
    // Predicated region
    $region10: #{tpu_custom_call.1} parent=1 // pred_check
      _
    $region11: #{tpu_custom_call.1} parent=1 // pred_check_branch
      %15 = sbr.rel (0) target = $region13
    $region12: #{tpu_custom_call.1} parent=1 // pred_region
      _
    $region13: #{tpu_custom_call.1} parent=1 // pred_fallthru
      _
    // Predicated region
    $region14: #{tpu_custom_call.1} parent=1 // pred_check
      _
    $region15: #{tpu_custom_call.1} parent=1 // pred_check_branch
      %17 = sbr.rel (0) target = $region17
    $region16: #{tpu_custom_call.1} parent=1 // pred_region
      _
    $region17: #{tpu_custom_call.1} parent=1 // pred_fallthru
      _
    %v18 = vld [vmem:[%s0] sm:$0x3]
    %vm19 = vcmask 254976
    %20 = vst.msk [vmem:[#allocation2] sm:$0x3] %vm19, %v18
    %v21 = vld [vmem:[%s1] sm:$0x7]
    %vm22 = vcmask 256000
    %23 = vst.msk [vmem:[#allocation2 + $0x2] sm:$0x7] %vm22, %v21
    %v24 = vld [vmem:[#allocation2] sm:$0x1f]
    %v25 = vld [vmem:[%s2] sm:$0xff]
    %v26 = vld [vmem:[%s2 + $0x8] sm:$0xff]
    %v27 = vld [vmem:[%s2 + $0x10] sm:$0xff]
    %v28 = vld [vmem:[%s2 + $0x18] sm:$0xff]
    %v29 = vld [vmem:[%s3] sm:$0x1]
    %v31 = vlaneseq
    %v32 = vshrl.u32 %v31, 7
    %v33 = vsub.s32 0, %v32
    %v34 = vrot.slane %v29, %v33
    %vm36 = vcmask 261120
    %v38 = vsel %vm36, %v24, 0
    %40 = vmatprep.subr.mxu0 0.0
    %41 = vmatpush1.msra.mxu0 %v25
    %42 = vmatprep.subr.mxu0 0.0
    %43 = vmatpush1.msra.mxu0 %v26
    %44 = vmatprep.subr.mxu0 0.0
    %45 = vmatpush1.msra.mxu0 %v27
    %46 = vmatprep.subr.mxu0 0.0
    %47 = vmatpush1.msra.mxu0 %v28
    %48 = vmatprep.subr.mxu0 0.0
    %49 = vmatpush1.msra.mxu0 0.0
    %50 = vmatprep.subr.mxu0 0.0
    %51 = vmatpush1.msra.mxu0 0.0
    %52 = vmatprep.subr.mxu0 0.0
    %53 = vmatpush1.msra.mxu0 0.0
    %54 = vmatprep.subr.mxu0 0.0
    %55 = vmatpush1.msra.mxu0 0.0
    %56 = vmatprep.subr.mxu0 0.0
    %57 = vmatpush1.msra.mxu0 0.0
    %58 = vmatprep.subr.mxu0 0.0
    %59 = vmatpush1.msra.mxu0 0.0
    %60 = vmatprep.subr.mxu0 0.0
    %61 = vmatpush1.msra.mxu0 0.0
    %62 = vmatprep.subr.mxu0 0.0
    %63 = vmatpush1.msra.mxu0 0.0
    %64 = vmatprep.subr.mxu0 0.0
    %65 = vmatpush1.msra.mxu0 0.0
    %66 = vmatprep.subr.mxu0 0.0
    %67 = vmatpush1.msra.mxu0 0.0
    %68 = vmatprep.subr.mxu0 0.0
    %69 = vmatpush1.msra.mxu0 0.0
    %70 = vmatprep.subr.mxu0 0.0
    %71 = vmatpush1.msra.mxu0 0.0
    %72 = vmatprep.subr.mxu0 0.0
    %73 = vmatpush1.msra.mxu0 0.0
    %74 = vmatprep.subr.mxu0 0.0
    %75 = vmatpush1.msra.mxu0 0.0
    %76 = vmatprep.subr.mxu0 0.0
    %77 = vmatpush1.msra.mxu0 0.0
    %78 = vmatprep.subr.mxu0 0.0
    %79 = vmatpush1.msra.mxu0 0.0
    %80 = vmatprep.subr.mxu0 0.0
    %81 = vmatpush1.msra.mxu0 0.0
    %82 = vmatprep.subr.mxu0 0.0
    %83 = vmatpush1.msra.mxu0 0.0
    %84 = vmatprep.subr.mxu0 0.0
    %85 = vmatpush1.msra.mxu0 0.0
    %86 = vmatprep.subr.mxu0 0.0
    %87 = vmatpush1.msra.mxu0 0.0
    %88 = vmatprep.subr.mxu0 0.0
    %89 = vmatpush1.msra.mxu0 0.0
    %90 = vmatprep.subr.mxu0 0.0
    %91 = vmatpush1.msra.mxu0 0.0
    %92 = vmatprep.subr.mxu0 0.0
    %93 = vmatpush1.msra.mxu0 0.0
    %94 = vmatprep.subr.mxu0 0.0
    %95 = vmatpush1.msra.mxu0 0.0
    %96 = vmatprep.subr.mxu0 0.0
    %97 = vmatpush1.msra.mxu0 0.0
    %98 = vmatprep.subr.mxu0 0.0
    %99 = vmatpush1.msra.mxu0 0.0
    %100 = vmatprep.subr.mxu0 0.0
    %101 = vmatpush1.msra.mxu0 0.0
    %102 = vmatprep.subr.mxu0 0.0
    %103 = vmatpush1.msra.mxu0 0.0
    %104 = vmatprep.mubr.f32.mxu0 0.0
    %105 = vmatmul.mubr.f32.gmra.mrb[0].mxu0 %v38
    %v106 = vpop.f32.mrb[0].mxu0
    %v107 = vadd.f32 %v34, %v106
    %v108 = vpop.f32.mrb[0].mxu0
    %109 = vdwg.mxu0
    %v110 = vtanh.pop %v107
    %vm111 = vcmask 61440
    %112 = vst.msk [vmem:[#allocation3] sm:$0x1f] %vm111, %v110
    // Predicated region
    $region18: #{tpu_custom_call.1} parent=1 // pred_check
      _
    $region19: #{tpu_custom_call.1} parent=1 // pred_check_branch
      %114 = sbr.rel (0) target = $region21
    $region20: #{tpu_custom_call.1} parent=1 // pred_region
      %s116 = ssub.s32 128, 128
      %117 = vsyncadd [#allocation4], %s116
      %s119 = sshll.u32 [#allocation3], 4
      %s120 = int_to_ptr.vmem [resolvable:$true] %s119
      %122 = dma.vmem_to_hbm [thread:$0]  %s120, 128, %s4, [#allocation4]
    $region21: #{tpu_custom_call.1} parent=1 // pred_fallthru
      _
    // Predicated region
    $region22: #{tpu_custom_call.1} parent=1 // pred_check
      _
    $region23: #{tpu_custom_call.1} parent=1 // pred_check_branch
      %124 = sbr.rel (0) target = $region25
    $region24: #{tpu_custom_call.1} parent=1 // pred_region
      %125 = dma.done [#allocation4], 128
    $region25: #{tpu_custom_call.1} parent=1 // pred_fallthru
      _
    %126 = vsyncpa [#allocation4], 1

</llo_original>
